<compile_context>
chip_gen: v7x
topology: tpu7x:2x2x1
jax: 0.10.0
libtpu: 0.0.40
codegen_flags: <defaults>
</compile_context>

<pallas_src>
import functools

import jax
import jax.numpy as jnp
from jax.experimental import pallas as pl
from jax.experimental.pallas import tpu as pltpu


def _ncc_kernel(a_ref, b_ref, i_ref, j_ref, out_ref, *,
                win, eps, squared, C, H, Ho, Nb, fuse_vertical):
    """One block of Nb batch elements per grid step: fused channel reduction
    -> MXU separable box filter (1 horizontal + 1 fused vertical matmul)
    -> NCC elementwise math -> per-step partial sum."""
    f32 = jnp.float32
    G = 5 * Nb                                   # number of (H, W) maps

    # ---- fused channel reduction (no (C,H,W) temporaries for squares) ----
    hw = i_ref.shape[2:]                         # (H, W)
    per_map = [[], [], [], [], []]               # sI, sJ, sI2, sJ2, sIJ
    for b in range(Nb):                          # static unroll, Nb small
        zero = jnp.zeros(hw, f32)
        sI = sJ = sI2 = sJ2 = sIJ = zero
        for c in range(C):                       # static unroll, C small
            Ic = i_ref[b, c].astype(f32)
            Jc = j_ref[b, c].astype(f32)
            sI = sI + Ic
            sJ = sJ + Jc
            sI2 = sI2 + Ic * Ic
            sJ2 = sJ2 + Jc * Jc
            sIJ = sIJ + Ic * Jc
        for k, m in enumerate((sI, sJ, sI2, sJ2, sIJ)):
            per_map[k].append(m)

    # Map-major, batch-minor stacking along the sublane axis: rows
    # [(m*Nb + b)*H, ...+H) hold map m of batch element b.  H is a multiple
    # of 8 at the tested shapes so every sub-block sits on an (8,128) tile
    # boundary and the later slices are free views.
    # TODO(synk): pad H up to a multiple of 8 before stacking for general H.
    slab = jnp.concatenate([m for maps in per_map for m in maps], axis=0)

    mm_dtype = a_ref.dtype                       # f32 default, bf16 optional
    Bm = b_ref[...]                              # (W, Wo) banded ones

    # ---- separable (win x win) box filter on the MXU ----------------------
    # Horizontal pass: one matmul for all 5*Nb maps (M is the cheap axis).
    T = jnp.dot(slab.astype(mm_dtype), Bm, preferred_element_type=f32)  # (G*H, Wo)

    # Vertical pass: one fused block-diagonal matmul (tiny-K, latency-bound
    # regime), or per-map dots when the block-diagonal zeros would waste
    # real MXU flops (large images).
    if fuse_vertical:
        F = jnp.dot(a_ref[...], T.astype(mm_dtype), preferred_element_type=f32)
    else:
        A = a_ref[...]                           # (Ho, H)
        F = jnp.concatenate(
            [jnp.dot(A, T[g * H:(g + 1) * H].astype(mm_dtype),
                     preferred_element_type=f32) for g in range(G)],
            axis=0)                              # (G*Ho, Wo)

    NbHo = Nb * Ho
    I_sum = F[0 * NbHo:1 * NbHo]
    J_sum = F[1 * NbHo:2 * NbHo]
    I2_sum = F[2 * NbHo:3 * NbHo]
    J2_sum = F[3 * NbHo:4 * NbHo]
    IJ_sum = F[4 * NbHo:5 * NbHo]

    # NOTE: deliberately matches the torch reference's np.prod(filt.shape)
    # quirk: win_size = C * C * win * win (NOT the true window element count).
    win_size = float(C * C * win * win)
    inv_ws = 1.0 / win_size
    u_I = I_sum * inv_ws
    u_J = J_sum * inv_ws
    cross = IJ_sum - u_J * I_sum - u_I * J_sum + u_I * u_J * win_size
    I_var = I2_sum - 2.0 * u_I * I_sum + u_I * u_I * win_size
    J_var = J2_sum - 2.0 * u_J * J_sum + u_J * u_J * win_size

    if squared:
        cc = (cross * cross) / jnp.maximum(I_var * J_var, eps)
    else:
        cc = (cross
              * jax.lax.rsqrt(jnp.maximum(I_var, eps))
              * jax.lax.rsqrt(jnp.maximum(J_var, eps)))

    # Per-step partial sum written as a full lane-dense (8,128) tile so the
    # store is an unmasked vst; JAX reads [:, 0, 0] outside the kernel.
    tot = jnp.sum(cc, keepdims=True)                       # (1, 1)
    out_ref[...] = jnp.broadcast_to(tot.reshape(1, 1, 1), out_ref.shape)


def _band(n_out, n_in, win, pad):
    # output[o] of the 'same'-padded 1-D box filter sums x[i] for
    # o - pad <= i <= o - pad + win - 1, clipped to [0, n_in). The clipping
    # implements the conv zero-padding, so inputs need no explicit padding.
    o = jnp.arange(n_out, dtype=jnp.int32)[:, None]
    i = jnp.arange(n_in, dtype=jnp.int32)[None, :]
    return ((i >= o - pad) & (i <= o - pad + (win - 1))).astype(jnp.float32)


def _pick_batch_block(N, C, H, W):
    """Largest divisor of N that leaves >= 2 grid steps (both v7x TCs get
    work) and keeps the double-buffered input blocks well inside VMEM."""
    nb = 1
    for d in range(1, N + 1):
        if N % d:
            continue
        if N // d < 2 and N > 1:
            continue
        if 4 * 2 * 2 * d * C * H * W > 8 * (1 << 20):
            continue
        nb = d
    return nb


def ncc_loss(y_true, y_pred, *, window=9, squared=False, eps=1e-6,
             batch_block=None, filter_in_bf16=False):
    N, C, H, W = y_true.shape
    pad = window // 2
    Ho = H + 2 * pad - window + 1
    Wo = W + 2 * pad - window + 1

    Nb = batch_block if batch_block is not None else _pick_batch_block(N, C, H, W)
    assert N % Nb == 0, "batch_block must divide the batch size"
    steps = N // Nb
    G = 5 * Nb

    # Fuse the 5*Nb vertical matmuls into one while the padded contraction is
    # small (MXU latency-bound); otherwise the block-diagonal zeros waste
    # real MXU flops and we fall back to per-map dots.
    fuse_vertical = (G * max(H, Ho)) <= 1024

    mm_dtype = jnp.bfloat16 if filter_in_bf16 else jnp.float32
    A = _band(Ho, H, window, pad)                        # (Ho, H): vertical pass
    B = _band(Wo, W, window, pad).T                      # (W, Wo): horizontal pass
    if fuse_vertical:
        A = jnp.kron(jnp.eye(G, dtype=jnp.float32), A)  # (G*Ho, G*H) block-diag
    A = A.astype(mm_dtype)                               # 0/1 -> exact in bf16
    B = B.astype(mm_dtype)

    kernel = functools.partial(
        _ncc_kernel, win=window, eps=eps, squared=squared,
        C=C, H=H, Ho=Ho, Nb=Nb, fuse_vertical=fuse_vertical)

    # VMEM budget from the actual working set instead of a hard-coded number
    # (48 MiB + scratch can overflow v7x's 64 MiB while fine on v5e/v6e).
    in_item = jnp.dtype(y_true.dtype).itemsize
    ab_item = jnp.dtype(mm_dtype).itemsize
    ws = (2 * 2 * Nb * C * H * W * in_item               # 2 inputs, double-buffered
          + 2 * (A.size + B.size) * ab_item              # A/B constants (2 bufs each)
          + 2 * 8 * 128 * 4                              # output tile
          + 4 * (G * H * W + G * H * Wo + G * Ho * Wo)   # slab / T / F
          + 4 * (5 * Nb * H * W + 10 * Nb * Ho * Wo))    # maps + cc temporaries
    vmem_limit = int(max(32 * (1 << 20), min(64 * (1 << 20), 2 * ws)))

    # TODO(synk): for very large images, tile H into row strips with a
    # (win-1) halo, generate A/B in-kernel from broadcasted_iota comparisons
    # (so the 0/1 constants are never buffered in VMEM), and exploit the band
    # structure of A/B instead of a dense H/W-wide contraction.
    partials = pl.pallas_call(
        kernel,
        out_shape=jax.ShapeDtypeStruct((steps, 8, 128), jnp.float32),
        grid_spec=pltpu.PrefetchScalarGridSpec(
            num_scalar_prefetch=0,
            grid=(steps,),
            in_specs=[
                pl.BlockSpec(A.shape, lambda n: (0, 0)),             # A (fetched once)
                pl.BlockSpec(B.shape, lambda n: (0, 0)),             # B (fetched once)
                pl.BlockSpec((Nb, C, H, W), lambda n: (n, 0, 0, 0)),
                pl.BlockSpec((Nb, C, H, W), lambda n: (n, 0, 0, 0)),
            ],
            out_specs=pl.BlockSpec((1, 8, 128), lambda n: (n, 0, 0)),
        ),
        compiler_params=pltpu.CompilerParams(
            dimension_semantics=("parallel",),
            vmem_limit_bytes=vmem_limit),
    )(A, B, y_true, y_pred)

    # cc is identical across the C output channels of the torch conv, so
    # mean over (N, C, Ho, Wo) == sum over (N, Ho, Wo) / (N * Ho * Wo).
    return 1.0 - jnp.sum(partials[:, 0, 0]) / float(N * Ho * Wo)


def ncc_loss_ref(y_true, y_pred, *, window=9, squared=False, eps=1e-6):
    """Pure-JAX reference reproducing the torch module exactly (NCHW conv2d)."""
    N, C, H, W = y_true.shape
    I = y_true.astype(jnp.float32)
    J = y_pred.astype(jnp.float32)
    filt = jnp.ones((C, C, window, window), jnp.float32)
    pad = window // 2

    def conv(x):
        return jax.lax.conv_general_dilated(
            x, filt, window_strides=(1, 1),
            padding=[(pad, pad), (pad, pad)],
            dimension_numbers=("NCHW", "OIHW", "NCHW"),
            precision=jax.lax.Precision.HIGHEST)

    I_sum, J_sum = conv(I), conv(J)
    I2_sum, J2_sum, IJ_sum = conv(I * I), conv(J * J), conv(I * J)
    win_size = float(C * C * window * window)
    u_I, u_J = I_sum / win_size, J_sum / win_size
    cross = IJ_sum - u_J * I_sum - u_I * J_sum + u_I * u_J * win_size
    I_var = I2_sum - 2 * u_I * I_sum + u_I * u_I * win_size
    J_var = J2_sum - 2 * u_J * J_sum + u_J * u_J * win_size
    if squared:
        cc = cross ** 2 / jnp.maximum(I_var * J_var, eps)
    else:
        cc = cross / (jnp.sqrt(jnp.maximum(I_var, eps)) *
                      jnp.sqrt(jnp.maximum(J_var, eps)))
    return -jnp.mean(cc) + 1.0


if __name__ == "__main__":
    key = jax.random.PRNGKey(0)
    k1, k2 = jax.random.split(key)
    N, C, H, W = 2, 4, 16, 16
    y_true = jax.random.normal(k1, (N, C, H, W), dtype=jnp.float32)
    y_pred = y_true + 0.1 * jax.random.normal(k2, (N, C, H, W), dtype=jnp.float32)

    # Tolerance allows for the (hardware-dependent) precision of the f32 MXU
    # box-filter matmuls; structural errors would be >> 1e-3.
    for squared in (False, True):
        loss = jax.block_until_ready(
            ncc_loss(y_true, y_pred, window=9, squared=squared, eps=1e-6))
        ref = jax.block_until_ready(
            ncc_loss_ref(y_true, y_pred, window=9, squared=squared, eps=1e-6))
        assert jnp.allclose(loss, ref, rtol=1e-3, atol=1e-3), (squared, loss, ref)

    print("KERNEL_OK")
</pallas_src>

<mosaic_0001>
module attributes {stable_mosaic.version = 11 : i64} {
  func.func @_ncc_kernel(%arg0: i32, %arg1: memref<80x80xf32, #tpu.memory_space<vmem>>, %arg2: memref<16x16xf32, #tpu.memory_space<vmem>>, %arg3: memref<1x4x16x16xf32, #tpu.memory_space<vmem>>, %arg4: memref<1x4x16x16xf32, #tpu.memory_space<vmem>>, %arg5: memref<1x8x128xf32, #tpu.memory_space<vmem>>) attributes {dimension_semantics = [#tpu.dimension_semantics<parallel>], iteration_bounds = array<i64: 2>, scalar_prefetch = 0 : i64, scratch_operands = 0 : i64, tpu.core_type = #tpu.core_type<tc>, window_params = [{pipeline_mode = #tpu.pipeline_mode<synchronous>, transform_indices = @transform_0, window_bounds = array<i64: 80, 80>}, {pipeline_mode = #tpu.pipeline_mode<synchronous>, transform_indices = @transform_1, window_bounds = array<i64: 16, 16>}, {transform_indices = @transform_2, window_bounds = array<i64: 1, 4, 16, 16>}, {transform_indices = @transform_3, window_bounds = array<i64: 1, 4, 16, 16>}, {transform_indices = @transform_4, window_bounds = array<i64: 1, 8, 128>}]} {
    %cst = arith.constant 0.000000e+00 : f32
    %0 = vector.broadcast %cst : f32 to vector<16x16xf32>
    %c0 = arith.constant 0 : index
    %c0_0 = arith.constant 0 : index
    %c0_1 = arith.constant 0 : index
    %c0_2 = arith.constant 0 : index
    %1 = vector.load %arg3[%c0, %c0_0, %c0_1, %c0_2] : memref<1x4x16x16xf32, #tpu.memory_space<vmem>>, vector<1x1x16x16xf32>
    %2 = vector.shape_cast %1 : vector<1x1x16x16xf32> to vector<16x16xf32>
    %c0_3 = arith.constant 0 : index
    %c0_4 = arith.constant 0 : index
    %c0_5 = arith.constant 0 : index
    %c0_6 = arith.constant 0 : index
    %3 = vector.load %arg4[%c0_3, %c0_4, %c0_5, %c0_6] : memref<1x4x16x16xf32, #tpu.memory_space<vmem>>, vector<1x1x16x16xf32>
    %4 = vector.shape_cast %3 : vector<1x1x16x16xf32> to vector<16x16xf32>
    %5 = arith.addf %0, %2 : vector<16x16xf32>
    %6 = arith.addf %0, %4 : vector<16x16xf32>
    %7 = arith.mulf %2, %2 : vector<16x16xf32>
    %8 = arith.addf %0, %7 : vector<16x16xf32>
    %9 = arith.mulf %4, %4 : vector<16x16xf32>
    %10 = arith.addf %0, %9 : vector<16x16xf32>
    %11 = arith.mulf %2, %4 : vector<16x16xf32>
    %12 = arith.addf %0, %11 : vector<16x16xf32>
    %c0_7 = arith.constant 0 : index
    %c1 = arith.constant 1 : index
    %c0_8 = arith.constant 0 : index
    %c0_9 = arith.constant 0 : index
    %13 = vector.load %arg3[%c0_7, %c1, %c0_8, %c0_9] : memref<1x4x16x16xf32, #tpu.memory_space<vmem>>, vector<1x1x16x16xf32>
    %14 = vector.shape_cast %13 : vector<1x1x16x16xf32> to vector<16x16xf32>
    %c0_10 = arith.constant 0 : index
    %c1_11 = arith.constant 1 : index
    %c0_12 = arith.constant 0 : index
    %c0_13 = arith.constant 0 : index
    %15 = vector.load %arg4[%c0_10, %c1_11, %c0_12, %c0_13] : memref<1x4x16x16xf32, #tpu.memory_space<vmem>>, vector<1x1x16x16xf32>
    %16 = vector.shape_cast %15 : vector<1x1x16x16xf32> to vector<16x16xf32>
    %17 = arith.addf %5, %14 : vector<16x16xf32>
    %18 = arith.addf %6, %16 : vector<16x16xf32>
    %19 = arith.mulf %14, %14 : vector<16x16xf32>
    %20 = arith.addf %8, %19 : vector<16x16xf32>
    %21 = arith.mulf %16, %16 : vector<16x16xf32>
    %22 = arith.addf %10, %21 : vector<16x16xf32>
    %23 = arith.mulf %14, %16 : vector<16x16xf32>
    %24 = arith.addf %12, %23 : vector<16x16xf32>
    %c0_14 = arith.constant 0 : index
    %c2 = arith.constant 2 : index
    %c0_15 = arith.constant 0 : index
    %c0_16 = arith.constant 0 : index
    %25 = vector.load %arg3[%c0_14, %c2, %c0_15, %c0_16] : memref<1x4x16x16xf32, #tpu.memory_space<vmem>>, vector<1x1x16x16xf32>
    %26 = vector.shape_cast %25 : vector<1x1x16x16xf32> to vector<16x16xf32>
    %c0_17 = arith.constant 0 : index
    %c2_18 = arith.constant 2 : index
    %c0_19 = arith.constant 0 : index
    %c0_20 = arith.constant 0 : index
    %27 = vector.load %arg4[%c0_17, %c2_18, %c0_19, %c0_20] : memref<1x4x16x16xf32, #tpu.memory_space<vmem>>, vector<1x1x16x16xf32>
    %28 = vector.shape_cast %27 : vector<1x1x16x16xf32> to vector<16x16xf32>
    %29 = arith.addf %17, %26 : vector<16x16xf32>
    %30 = arith.addf %18, %28 : vector<16x16xf32>
    %31 = arith.mulf %26, %26 : vector<16x16xf32>
    %32 = arith.addf %20, %31 : vector<16x16xf32>
    %33 = arith.mulf %28, %28 : vector<16x16xf32>
    %34 = arith.addf %22, %33 : vector<16x16xf32>
    %35 = arith.mulf %26, %28 : vector<16x16xf32>
    %36 = arith.addf %24, %35 : vector<16x16xf32>
    %c0_21 = arith.constant 0 : index
    %c3 = arith.constant 3 : index
    %c0_22 = arith.constant 0 : index
    %c0_23 = arith.constant 0 : index
    %37 = vector.load %arg3[%c0_21, %c3, %c0_22, %c0_23] : memref<1x4x16x16xf32, #tpu.memory_space<vmem>>, vector<1x1x16x16xf32>
    %38 = vector.shape_cast %37 : vector<1x1x16x16xf32> to vector<16x16xf32>
    %c0_24 = arith.constant 0 : index
    %c3_25 = arith.constant 3 : index
    %c0_26 = arith.constant 0 : index
    %c0_27 = arith.constant 0 : index
    %39 = vector.load %arg4[%c0_24, %c3_25, %c0_26, %c0_27] : memref<1x4x16x16xf32, #tpu.memory_space<vmem>>, vector<1x1x16x16xf32>
    %40 = vector.shape_cast %39 : vector<1x1x16x16xf32> to vector<16x16xf32>
    %41 = arith.addf %29, %38 : vector<16x16xf32>
    %42 = arith.addf %30, %40 : vector<16x16xf32>
    %43 = arith.mulf %38, %38 : vector<16x16xf32>
    %44 = arith.addf %32, %43 : vector<16x16xf32>
    %45 = arith.mulf %40, %40 : vector<16x16xf32>
    %46 = arith.addf %34, %45 : vector<16x16xf32>
    %47 = arith.mulf %38, %40 : vector<16x16xf32>
    %48 = arith.addf %36, %47 : vector<16x16xf32>
    %49 = tpu.concatenate %41, %42, %44, %46, %48 in 0 : vector<16x16xf32>, vector<16x16xf32>, vector<16x16xf32>, vector<16x16xf32>, vector<16x16xf32> -> vector<80x16xf32>
    %c0_28 = arith.constant 0 : index
    %c0_29 = arith.constant 0 : index
    %50 = vector.load %arg2[%c0_28, %c0_29] : memref<16x16xf32, #tpu.memory_space<vmem>>, vector<16x16xf32>
    %cst_30 = arith.constant dense<0.000000e+00> : vector<80x16xf32>
    %51 = tpu.matmul %49, %50, %cst_30 {dimension_numbers = #tpu.dot_dimension_numbers<[1], [0], [0], [1], [0, 0, 1, 1], [], []>} : vector<80x16xf32>, vector<16x16xf32>, vector<80x16xf32> -> vector<80x16xf32>
    %c0_31 = arith.constant 0 : index
    %c0_32 = arith.constant 0 : index
    %52 = vector.load %arg1[%c0_31, %c0_32] : memref<80x80xf32, #tpu.memory_space<vmem>>, vector<80x80xf32>
    %cst_33 = arith.constant dense<0.000000e+00> : vector<80x16xf32>
    %53 = tpu.matmul %52, %51, %cst_33 {dimension_numbers = #tpu.dot_dimension_numbers<[1], [0], [0], [1], [0, 0, 1, 1], [], []>} : vector<80x80xf32>, vector<80x16xf32>, vector<80x16xf32> -> vector<80x16xf32>
    %54 = vector.extract_strided_slice %53 {offsets = [0, 0], sizes = [16, 16], strides = [1, 1]} : vector<80x16xf32> to vector<16x16xf32>
    %55 = vector.extract_strided_slice %53 {offsets = [16, 0], sizes = [16, 16], strides = [1, 1]} : vector<80x16xf32> to vector<16x16xf32>
    %56 = vector.extract_strided_slice %53 {offsets = [32, 0], sizes = [16, 16], strides = [1, 1]} : vector<80x16xf32> to vector<16x16xf32>
    %57 = vector.extract_strided_slice %53 {offsets = [48, 0], sizes = [16, 16], strides = [1, 1]} : vector<80x16xf32> to vector<16x16xf32>
    %58 = vector.extract_strided_slice %53 {offsets = [64, 0], sizes = [16, 16], strides = [1, 1]} : vector<80x16xf32> to vector<16x16xf32>
    %cst_34 = arith.constant 7.71604944E-4 : f32
    %59 = vector.broadcast %cst_34 : f32 to vector<16x16xf32>
    %60 = arith.mulf %54, %59 : vector<16x16xf32>
    %cst_35 = arith.constant 7.71604944E-4 : f32
    %61 = vector.broadcast %cst_35 : f32 to vector<16x16xf32>
    %62 = arith.mulf %55, %61 : vector<16x16xf32>
    %63 = arith.mulf %62, %54 : vector<16x16xf32>
    %64 = arith.subf %58, %63 : vector<16x16xf32>
    %65 = arith.mulf %60, %55 : vector<16x16xf32>
    %66 = arith.subf %64, %65 : vector<16x16xf32>
    %67 = arith.mulf %60, %62 : vector<16x16xf32>
    %cst_36 = arith.constant 1.296000e+03 : f32
    %68 = vector.broadcast %cst_36 : f32 to vector<16x16xf32>
    %69 = arith.mulf %67, %68 : vector<16x16xf32>
    %70 = arith.addf %66, %69 : vector<16x16xf32>
    %cst_37 = arith.constant 2.000000e+00 : f32
    %71 = vector.broadcast %cst_37 : f32 to vector<16x16xf32>
    %72 = arith.mulf %71, %60 : vector<16x16xf32>
    %73 = arith.mulf %72, %54 : vector<16x16xf32>
    %74 = arith.subf %56, %73 : vector<16x16xf32>
    %75 = arith.mulf %60, %60 : vector<16x16xf32>
    %cst_38 = arith.constant 1.296000e+03 : f32
    %76 = vector.broadcast %cst_38 : f32 to vector<16x16xf32>
    %77 = arith.mulf %75, %76 : vector<16x16xf32>
    %78 = arith.addf %74, %77 : vector<16x16xf32>
    %cst_39 = arith.constant 2.000000e+00 : f32
    %79 = vector.broadcast %cst_39 : f32 to vector<16x16xf32>
    %80 = arith.mulf %79, %62 : vector<16x16xf32>
    %81 = arith.mulf %80, %55 : vector<16x16xf32>
    %82 = arith.subf %57, %81 : vector<16x16xf32>
    %83 = arith.mulf %62, %62 : vector<16x16xf32>
    %cst_40 = arith.constant 1.296000e+03 : f32
    %84 = vector.broadcast %cst_40 : f32 to vector<16x16xf32>
    %85 = arith.mulf %83, %84 : vector<16x16xf32>
    %86 = arith.addf %82, %85 : vector<16x16xf32>
    %cst_41 = arith.constant 9.99999997E-7 : f32
    %87 = vector.broadcast %cst_41 : f32 to vector<16x16xf32>
    %88 = arith.maximumf %78, %87 : vector<16x16xf32>
    %89 = math.rsqrt %88 : vector<16x16xf32>
    %90 = arith.mulf %70, %89 : vector<16x16xf32>
    %cst_42 = arith.constant 9.99999997E-7 : f32
    %91 = vector.broadcast %cst_42 : f32 to vector<16x16xf32>
    %92 = arith.maximumf %86, %91 : vector<16x16xf32>
    %93 = math.rsqrt %92 : vector<16x16xf32>
    %94 = arith.mulf %90, %93 : vector<16x16xf32>
    %95 = vector.shape_cast %94 : vector<16x16xf32> to vector<1x16x16xf32>
    %cst_43 = arith.constant dense<0.000000e+00> : vector<1xf32>
    %96 = vector.multi_reduction <add>, %95, %cst_43 [1, 2] : vector<1x16x16xf32> to vector<1xf32>
    %97 = vector.shape_cast %96 : vector<1xf32> to vector<1x1x1xf32>
    %98 = vector.extract %97[0, 0, 0] : f32 from vector<1x1x1xf32>
    %99 = vector.broadcast %98 : f32 to vector<1x1xf32>
    %100 = vector.shape_cast %99 : vector<1x1xf32> to vector<1x1x1xf32>
    %101 = vector.shape_cast %100 : vector<1x1x1xf32> to vector<1x1x1xf32>
    %102 = vector.broadcast %101 : vector<1x1x1xf32> to vector<1x8x128xf32>
    %c0_44 = arith.constant 0 : index
    %c0_45 = arith.constant 0 : index
    %c0_46 = arith.constant 0 : index
    %103 = vector.load %arg5[%c0_44, %c0_45, %c0_46] : memref<1x8x128xf32, #tpu.memory_space<vmem>>, vector<1x8x128xf32>
    tpu.vector_store %arg5[%c0_44, %c0_45, %c0_46], %102 {strides = array<i32>} : memref<1x8x128xf32, #tpu.memory_space<vmem>>, vector<1x8x128xf32>,
    return
  }
  func.func @transform_0(%arg0: i32) -> (i32, i32) {
    %c0_i32 = arith.constant 0 : i32
    %c0_i32_0 = arith.constant 0 : i32
    %c0_i32_1 = arith.constant 0 : i32
    return %c0_i32, %c0_i32_0 : i32, i32
  }
  func.func @transform_1(%arg0: i32) -> (i32, i32) {
    %c0_i32 = arith.constant 0 : i32
    %c0_i32_0 = arith.constant 0 : i32
    %c0_i32_1 = arith.constant 0 : i32
    return %c0_i32, %c0_i32_0 : i32, i32
  }
  func.func @transform_2(%arg0: i32) -> (i32, i32, i32, i32) {
    %c0_i32 = arith.constant 0 : i32
    %c0_i32_0 = arith.constant 0 : i32
    %c0_i32_1 = arith.constant 0 : i32
    %c0_i32_2 = arith.constant 0 : i32
    return %arg0, %c0_i32, %c0_i32_0, %c0_i32_1 : i32, i32, i32, i32
  }
  func.func @transform_3(%arg0: i32) -> (i32, i32, i32, i32) {
    %c0_i32 = arith.constant 0 : i32
    %c0_i32_0 = arith.constant 0 : i32
    %c0_i32_1 = arith.constant 0 : i32
    %c0_i32_2 = arith.constant 0 : i32
    return %arg0, %c0_i32, %c0_i32_0, %c0_i32_1 : i32, i32, i32, i32
  }
  func.func @transform_4(%arg0: i32) -> (i32, i32, i32) {
    %c0_i32 = arith.constant 0 : i32
    %c0_i32_0 = arith.constant 0 : i32
    %c0_i32_1 = arith.constant 0 : i32
    return %arg0, %c0_i32, %c0_i32_0 : i32, i32, i32
  }
}

</mosaic_0001>

<llo_original>
// kernel: tpu_custom_call.1
$region0: #{tpu_custom_call.1}
  #allocation0 [shape = 'u32[]', space=smem, size = 0x4, offset = 0x4, fixed_abs, tag = 'smem constant byte address 0x4 - core index']
  #allocation1 [shape = 'u32[144,128]{1,0:T(1,128)}', space=vmem, size = 0x12000, scoped, tag = 'internal scratch']
  %s0 = inlined_call_operand.hbm [shape: f32[80,80], index: 0, kind: input, shape index: {}]
  %s1 = inlined_call_operand.hbm [shape: f32[16,16], index: 1, kind: input, shape index: {}]
  %s2 = inlined_call_operand.hbm [shape: f32[2,4,16,16], index: 2, kind: input, shape index: {}]
  %s3 = inlined_call_operand.hbm [shape: f32[2,4,16,16], index: 3, kind: input, shape index: {}]
  %s4 = inlined_call_operand.hbm [shape: f32[2,8,128], index: 4, kind: output, shape index: {}]
  %s5 = sld [smem:[#allocation0]]
  $region65: #{tpu_custom_call.1} parent=0
    _
  %s7 = ssub.s32 1, %s5
  %s8 = scalar_select 0, %s7, %s5
  $region1: #{tpu_custom_call.1} parent=0
    #allocation2 [shape = 'u8[40960]{0}', space=vmem, size = 0xa000, scoped, tag = 'input window, operand 0, single buffered']
    #allocation3 [shape = 's32[2]{0}', space=sflag, size = 0x8, scoped, tag = 'scoped memory for tpu_custom_call.1']
    #allocation4 [shape = 's32[2]{0}', space=sflag, size = 0x8, scoped, tag = 'scoped memory for tpu_custom_call.1']
    #allocation5 [shape = 'u8[8192]{0}', space=vmem, size = 0x2000, scoped, tag = 'input window, operand 1, single buffered']
    #allocation6 [shape = 's32[1]{0}', space=sflag, size = 0x4, scoped, tag = 'scoped memory for tpu_custom_call.1']
    #allocation7 [shape = 'u8[65536]{0}', space=vmem, size = 0x10000, scoped, tag = 'input window, operand 2']
    #allocation8 [shape = 'u8[65536]{0}', space=vmem, size = 0x10000, scoped, tag = 'input window, operand 3']
    #allocation9 [shape = 'u8[8192]{0}', space=vmem, size = 0x2000, scoped, tag = 'output window, operand 0']
    %9 = vsyncpa [#allocation3], 0
    %10 = vsyncpa [#allocation6], 0
    %11 = vsyncpa [#allocation4], 0
    %s12 = scalar_lea.sflag [#allocation4], 1
    %13 = vsyncpa %s12, 0
    loop: start=0, step=1, limit=4
    $region2: #{tpu_custom_call.1} parent=1 // loop_pre_header
      _
    $region3: #{tpu_custom_call.1} parent=1 // loop_header
      %s15 = sphi 0, %s19
      %p16 = scmp.ge.s32.totalorder %s15, 4
      %s23 = sphi 0, %s23
      %s25 = sphi 0, %s23
      %s26 = sphi 0, %s25
      %s40 = sphi 0, %s26
      %s44 = sphi 0, %s44
      %s46 = sphi 0, %s44
      %s47 = sphi 0, %s46
      %s61 = sphi 0, %s47
      %s67 = sphi 0, %s69
      %s70 = sphi 0, %s67
      %s71 = sphi 0, %s70
      %s87 = sphi 0, %s71
      %s93 = sphi 0, %s95
      %s96 = sphi 0, %s93
      %s97 = sphi 0, %s96
      %s113 = sphi 0, %s97
      %s119 = sphi 0, %s121
      %s122 = sphi 0, %s119
      %s123 = sphi 0, %s122
      %s139 = sphi 0, %s123
    $region4: #{tpu_custom_call.1} parent=1 // loop_header_branch
      %18 = sbr.rel (%p16) target = $region8
    $region5: #{tpu_custom_call.1} parent=1 // loop_body
      %s20 = ssub.s32 %s15, 1
      %s21 = ssub.s32 %s15, 2
      %s22 = sadd.s32 %s15, 1
      %s24 = sadd.s32 %s23, 1
      %p27 = scmp.eq.s32.totalorder %s15, 1
      %p28 = scmp.ne.s32.totalorder %s23, %s25
      %p29 = scmp.eq.s32.totalorder %s15, 0
      %p30 = por %p28, %p29
      %p31 = scmp.ne.s32.totalorder %s23, %s25
      %p32 = scmp.eq.s32.totalorder %s20, 1
      %p33 = por %p31, %p32
      %p34 = scmp.ne.s32.totalorder %s25, %s26
      %p35 = scmp.eq.s32.totalorder %s20, 0
      %p36 = por %p34, %p35
      %p37 = scmp.ne.s32.totalorder %s25, %s26
      %p38 = scmp.eq.s32.totalorder %s21, 1
      %p39 = por %p37, %p38
      %p41 = scmp.ne.s32.totalorder %s26, %s40
      %p42 = scmp.eq.s32.totalorder %s21, 0
      %p43 = por %p41, %p42
      %s45 = sadd.s32 %s44, 1
      %p48 = scmp.eq.s32.totalorder %s15, 1
      %p49 = scmp.ne.s32.totalorder %s44, %s46
      %p50 = scmp.eq.s32.totalorder %s15, 0
      %p51 = por %p49, %p50
      %p52 = scmp.ne.s32.totalorder %s44, %s46
      %p53 = scmp.eq.s32.totalorder %s20, 1
      %p54 = por %p52, %p53
      %p55 = scmp.ne.s32.totalorder %s46, %s47
      %p56 = scmp.eq.s32.totalorder %s20, 0
      %p57 = por %p55, %p56
      %p58 = scmp.ne.s32.totalorder %s46, %s47
      %p59 = scmp.eq.s32.totalorder %s21, 1
      %p60 = por %p58, %p59
      %p62 = scmp.ne.s32.totalorder %s47, %s61
      %p63 = scmp.eq.s32.totalorder %s21, 0
      %p64 = por %p62, %p63
      %s65 = ssub.s32 %s15, %s22
      %p66 = scmp.eq.s32.totalorder %s65, 0
      %s68 = sadd.s32 %s67, 1
      %s69 = scalar_select %p66, %s67, %s68
      %p72 = pneg %p66
      %p73 = scmp.eq.s32.totalorder %s15, 1
      %p74 = por %p72, %p73
      %p75 = scmp.ne.s32.totalorder %s67, %s70
      %p76 = scmp.eq.s32.totalorder %s15, 0
      %p77 = por %p75, %p76
      %p78 = scmp.ne.s32.totalorder %s67, %s70
      %p79 = scmp.eq.s32.totalorder %s20, 1
      %p80 = por %p78, %p79
      %p81 = scmp.ne.s32.totalorder %s70, %s71
      %p82 = scmp.eq.s32.totalorder %s20, 0
      %p83 = por %p81, %p82
      %p84 = scmp.ne.s32.totalorder %s70, %s71
      %p85 = scmp.eq.s32.totalorder %s21, 1
      %p86 = por %p84, %p85
      %p88 = scmp.ne.s32.totalorder %s71, %s87
      %p89 = scmp.eq.s32.totalorder %s21, 0
      %p90 = por %p88, %p89
      %s91 = ssub.s32 %s15, %s22
      %p92 = scmp.eq.s32.totalorder %s91, 0
      %s94 = sadd.s32 %s93, 1
      %s95 = scalar_select %p92, %s93, %s94
      %p98 = pneg %p92
      %p99 = scmp.eq.s32.totalorder %s15, 1
      %p100 = por %p98, %p99
      %p101 = scmp.ne.s32.totalorder %s93, %s96
      %p102 = scmp.eq.s32.totalorder %s15, 0
      %p103 = por %p101, %p102
      %p104 = scmp.ne.s32.totalorder %s93, %s96
      %p105 = scmp.eq.s32.totalorder %s20, 1
      %p106 = por %p104, %p105
      %p107 = scmp.ne.s32.totalorder %s96, %s97
      %p108 = scmp.eq.s32.totalorder %s20, 0
      %p109 = por %p107, %p108
      %p110 = scmp.ne.s32.totalorder %s96, %s97
      %p111 = scmp.eq.s32.totalorder %s21, 1
      %p112 = por %p110, %p111
      %p114 = scmp.ne.s32.totalorder %s97, %s113
      %p115 = scmp.eq.s32.totalorder %s21, 0
      %p116 = por %p114, %p115
      %s117 = ssub.s32 %s15, %s22
      %p118 = scmp.eq.s32.totalorder %s117, 0
      %s120 = sadd.s32 %s119, 1
      %s121 = scalar_select %p118, %s119, %s120
      %p124 = pneg %p118
      %p125 = scmp.eq.s32.totalorder %s15, 1
      %p126 = por %p124, %p125
      %p127 = scmp.ne.s32.totalorder %s119, %s122
      %p128 = scmp.eq.s32.totalorder %s15, 0
      %p129 = por %p127, %p128
      %p130 = scmp.ne.s32.totalorder %s119, %s122
      %p131 = scmp.eq.s32.totalorder %s20, 1
      %p132 = por %p130, %p131
      %p133 = scmp.ne.s32.totalorder %s122, %s123
      %p134 = scmp.eq.s32.totalorder %s20, 0
      %p135 = por %p133, %p134
      %p136 = scmp.ne.s32.totalorder %s122, %s123
      %p137 = scmp.eq.s32.totalorder %s21, 1
      %p138 = por %p136, %p137
      %p140 = scmp.ne.s32.totalorder %s123, %s139
      %p141 = scmp.eq.s32.totalorder %s21, 0
      %p142 = por %p140, %p141
      %p143 = scmp.le.s32.totalorder 1, %s15
      %p144 = scmp.lt.s32.totalorder %s15, 3
      %p145 = pnand %p143, %p144
      %p146 = pneg %p145
      // Predicated region
      $region9: #{tpu_custom_call.1} parent=5 // pred_check
        _
      $region10: #{tpu_custom_call.1} parent=5 // pred_check_branch
        %148 = sbr.rel (%p145) target = $region12
      $region11: #{tpu_custom_call.1} parent=5 // pred_region
        %s149 = ssub.s32 %s15, 1
        // Predicated region
        $region13: #{tpu_custom_call.1} parent=11 // pred_check
          %p150 = pneg %p36
        $region14: #{tpu_custom_call.1} parent=11 // pred_check_branch
          %152 = sbr.rel (%p150) target = $region16
        $region15: #{tpu_custom_call.1} parent=11 // pred_region
          %s154 = ssub.s32 1280, 1280
          %155 = vsyncadd [#allocation3], %s154
          %s156 = sshll.u32 [#allocation2], 4
          %s157 = int_to_ptr.vmem [resolvable:$true] %s156
          %162 = dma.hbm_to_vmem [thread:$0]  %s0, 1280, %s157, [#allocation3], 128, 128, 8
        $region16: #{tpu_custom_call.1} parent=11 // pred_fallthru
          _
        // Predicated region
        $region17: #{tpu_custom_call.1} parent=11 // pred_check
          %p163 = pneg %p57
        $region18: #{tpu_custom_call.1} parent=11 // pred_check_branch
          %165 = sbr.rel (%p163) target = $region20
        $region19: #{tpu_custom_call.1} parent=11 // pred_region
          %s167 = ssub.s32 256, 256
          %168 = vsyncadd [#allocation6], %s167
          %s169 = sshll.u32 [#allocation5], 4
          %s170 = int_to_ptr.vmem [resolvable:$true] %s169
          %175 = dma.hbm_to_vmem [thread:$0]  %s1, 256, %s170, [#allocation6], 128, 128, 8
        $region20: #{tpu_custom_call.1} parent=11 // pred_fallthru
          _
      $region12: #{tpu_custom_call.1} parent=5 // pred_fallthru
        _
      %p176 = scmp.lt.s32.totalorder %s15, 2
      // Predicated region
      $region21: #{tpu_custom_call.1} parent=5 // pred_check
        %p177 = pneg %p176
      $region22: #{tpu_custom_call.1} parent=5 // pred_check_branch
        %179 = sbr.rel (%p177) target = $region24
      $region23: #{tpu_custom_call.1} parent=5 // pred_region
        // Predicated region
        $region25: #{tpu_custom_call.1} parent=23 // pred_check
          %p180 = pneg %p77
        $region26: #{tpu_custom_call.1} parent=23 // pred_check_branch
          %182 = sbr.rel (%p180) target = $region28
        $region27: #{tpu_custom_call.1} parent=23 // pred_region
          %s183 = sand.u32 %s15, 1
          %s184 = scalar_lea.sflag [#allocation3], %s183
          %s185 = sand.u32 %s67, 1
          %s186 = smul.addr %s185, 64
          %s187 = scalar_lea.vmem [#allocation7], %s186
          %s189 = ssub.s32 1024, 1024
          %190 = vsyncadd %s184, %s189
          %s191 = smul.addr %s15, 8
          %s192 = smul.addr %s191, 128
          %s193 = scalar_lea.hbm %s2, %s192
          %s194 = sshll.u32 %s187, 4
          %s195 = int_to_ptr.vmem [resolvable:$true] %s194
          %200 = dma.hbm_to_vmem [thread:$0]  %s193, 1024, %s195, %s184, 128, 128, 8
        $region28: #{tpu_custom_call.1} parent=23 // pred_fallthru
          _
        // Predicated region
        $region29: #{tpu_custom_call.1} parent=23 // pred_check
          %p201 = pneg %p103
        $region30: #{tpu_custom_call.1} parent=23 // pred_check_branch
          %203 = sbr.rel (%p201) target = $region32
        $region31: #{tpu_custom_call.1} parent=23 // pred_region
          %s204 = sand.u32 %s15, 1
          %s205 = scalar_lea.sflag [#allocation3], %s204
          %s206 = sand.u32 %s93, 1
          %s207 = smul.addr %s206, 64
          %s208 = scalar_lea.vmem [#allocation8], %s207
          %s210 = ssub.s32 1024, 1024
          %211 = vsyncadd %s205, %s210
          %s212 = smul.addr %s15, 8
          %s213 = smul.addr %s212, 128
          %s214 = scalar_lea.hbm %s3, %s213
          %s215 = sshll.u32 %s208, 4
          %s216 = int_to_ptr.vmem [resolvable:$true] %s215
          %221 = dma.hbm_to_vmem [thread:$0]  %s214, 1024, %s216, %s205, 128, 128, 8
        $region32: #{tpu_custom_call.1} parent=23 // pred_fallthru
          _
      $region24: #{tpu_custom_call.1} parent=5 // pred_fallthru
        _
      %p222 = scmp.le.s32.totalorder 1, %s15
      %p223 = scmp.lt.s32.totalorder %s15, 3
      %p224 = pnand %p222, %p223
      %p225 = pneg %p224
      // Predicated region
      $region33: #{tpu_custom_call.1} parent=5 // pred_check
        _
      $region34: #{tpu_custom_call.1} parent=5 // pred_check_branch
        %227 = sbr.rel (%p224) target = $region36
      $region35: #{tpu_custom_call.1} parent=5 // pred_region
        %s228 = ssub.s32 %s15, 1
        // Predicated region
        $region37: #{tpu_custom_call.1} parent=35 // pred_check
          %p229 = pneg %p36
        $region38: #{tpu_custom_call.1} parent=35 // pred_check_branch
          %231 = sbr.rel (%p229) target = $region40
        $region39: #{tpu_custom_call.1} parent=35 // pred_region
          %232 = dma.done [#allocation3], 1280
        $region40: #{tpu_custom_call.1} parent=35 // pred_fallthru
          _
        // Predicated region
        $region41: #{tpu_custom_call.1} parent=35 // pred_check
          %p233 = pneg %p57
        $region42: #{tpu_custom_call.1} parent=35 // pred_check_branch
          %235 = sbr.rel (%p233) target = $region44
        $region43: #{tpu_custom_call.1} parent=35 // pred_region
          %236 = dma.done [#allocation6], 256
        $region44: #{tpu_custom_call.1} parent=35 // pred_fallthru
          _
        %s237 = sand.u32 %s20, 1
        %s238 = scalar_lea.sflag [#allocation3], %s237
        %s239 = sand.u32 %s70, 1
        %s240 = smul.addr %s239, 64
        %s241 = scalar_lea.vmem [#allocation7], %s240
        // Predicated region
        $region45: #{tpu_custom_call.1} parent=35 // pred_check
          %p242 = pneg %p83
        $region46: #{tpu_custom_call.1} parent=35 // pred_check_branch
          %244 = sbr.rel (%p242) target = $region48
        $region47: #{tpu_custom_call.1} parent=35 // pred_region
          %245 = dma.done %s238, 1024
        $region48: #{tpu_custom_call.1} parent=35 // pred_fallthru
          _
        %s246 = sand.u32 %s20, 1
        %s247 = scalar_lea.sflag [#allocation3], %s246
        %s248 = sand.u32 %s96, 1
        %s249 = smul.addr %s248, 64
        %s250 = scalar_lea.vmem [#allocation8], %s249
        // Predicated region
        $region49: #{tpu_custom_call.1} parent=35 // pred_check
          %p251 = pneg %p109
        $region50: #{tpu_custom_call.1} parent=35 // pred_check_branch
          %253 = sbr.rel (%p251) target = $region52
        $region51: #{tpu_custom_call.1} parent=35 // pred_region
          %254 = dma.done %s247, 1024
        $region52: #{tpu_custom_call.1} parent=35 // pred_fallthru
          _
        %p255 = pneg %p36
        %p256 = pneg %p33
        %p257 = pneg %p57
        %p258 = pneg %p54
        %s259 = sand.u32 %s20, 1
        %s260 = scalar_lea.sflag [#allocation3], %s259
        %s261 = sand.u32 %s70, 1
        %s262 = smul.addr %s261, 64
        %s263 = scalar_lea.vmem [#allocation7], %s262
        %p264 = pneg %p83
        %p265 = pneg %p80
        %s266 = sand.u32 %s20, 1
        %s267 = scalar_lea.sflag [#allocation3], %s266
        %s268 = sand.u32 %s96, 1
        %s269 = smul.addr %s268, 64
        %s270 = scalar_lea.vmem [#allocation8], %s269
        %p271 = pneg %p109
        %p272 = pneg %p106
        %p273 = pneg %p135
        %p274 = pneg %p132
        %s275 = sand.u32 %s122, 1
        %s276 = scalar_lea.sflag [#allocation4], %s275
        %s277 = sand.u32 %s122, 1
        %s278 = smul.addr %s277, 8
        %s279 = scalar_lea.vmem [#allocation9], %s278
        %v280 = vld [vmem:[%s241] sm:$0xff]
        %v281 = vld [vmem:[%s241 + $0x8] sm:$0xff]
        %v282 = vld [vmem:[%s250] sm:$0xff]
        %v283 = vld [vmem:[%s250 + $0x8] sm:$0xff]
        %v284 = vadd.f32 %v280, 0.0
        %v285 = vadd.f32 %v281, 0.0
        %v286 = vadd.f32 %v282, 0.0
        %v287 = vadd.f32 %v283, 0.0
        %v288 = vmul.f32 %v280, %v280
        %v289 = vmul.f32 %v281, %v281
        %v290 = vadd.f32 %v288, 0.0
        %v291 = vadd.f32 %v289, 0.0
        %v292 = vmul.f32 %v282, %v282
        %v293 = vmul.f32 %v283, %v283
        %v294 = vadd.f32 %v292, 0.0
        %v295 = vadd.f32 %v293, 0.0
        %v296 = vmul.f32 %v280, %v282
        %v297 = vmul.f32 %v281, %v283
        %v298 = vadd.f32 %v296, 0.0
        %v299 = vadd.f32 %v297, 0.0
        %s300 = scalar_lea.vmem %s241, 16 [#allocation7]
        %v301 = vld [vmem:[%s300] sm:$0xff]
        %v302 = vld [vmem:[%s300 + $0x8] sm:$0xff]
        %s303 = scalar_lea.vmem %s250, 16 [#allocation8]
        %v304 = vld [vmem:[%s303] sm:$0xff]
        %v305 = vld [vmem:[%s303 + $0x8] sm:$0xff]
        %v306 = vadd.f32 %v284, %v301
        %v307 = vadd.f32 %v285, %v302
        %v308 = vadd.f32 %v286, %v304
        %v309 = vadd.f32 %v287, %v305
        %v310 = vmul.f32 %v301, %v301
        %v311 = vmul.f32 %v302, %v302
        %v312 = vadd.f32 %v290, %v310
        %v313 = vadd.f32 %v291, %v311
        %v314 = vmul.f32 %v304, %v304
        %v315 = vmul.f32 %v305, %v305
        %v316 = vadd.f32 %v294, %v314
        %v317 = vadd.f32 %v295, %v315
        %v318 = vmul.f32 %v301, %v304
        %v319 = vmul.f32 %v302, %v305
        %v320 = vadd.f32 %v298, %v318
        %v321 = vadd.f32 %v299, %v319
        %s322 = scalar_lea.vmem %s241, 32 [#allocation7]
        %v323 = vld [vmem:[%s322] sm:$0xff]
        %v324 = vld [vmem:[%s322 + $0x8] sm:$0xff]
        %s325 = scalar_lea.vmem %s250, 32 [#allocation8]
        %v326 = vld [vmem:[%s325] sm:$0xff]
        %v327 = vld [vmem:[%s325 + $0x8] sm:$0xff]
        %v328 = vadd.f32 %v306, %v323
        %v329 = vadd.f32 %v307, %v324
        %v330 = vadd.f32 %v308, %v326
        %v331 = vadd.f32 %v309, %v327
        %v332 = vmul.f32 %v323, %v323
        %v333 = vmul.f32 %v324, %v324
        %v334 = vadd.f32 %v312, %v332
        %v335 = vadd.f32 %v313, %v333
        %v336 = vmul.f32 %v326, %v326
        %v337 = vmul.f32 %v327, %v327
        %v338 = vadd.f32 %v316, %v336
        %v339 = vadd.f32 %v317, %v337
        %v340 = vmul.f32 %v323, %v326
        %v341 = vmul.f32 %v324, %v327
        %v342 = vadd.f32 %v320, %v340
        %v343 = vadd.f32 %v321, %v341
        %s344 = scalar_lea.vmem %s241, 48 [#allocation7]
        %v345 = vld [vmem:[%s344] sm:$0xff]
        %v346 = vld [vmem:[%s344 + $0x8] sm:$0xff]
        %s347 = scalar_lea.vmem %s250, 48 [#allocation8]
        %v348 = vld [vmem:[%s347] sm:$0xff]
        %v349 = vld [vmem:[%s347 + $0x8] sm:$0xff]
        %v350 = vadd.f32 %v328, %v345
        %v351 = vadd.f32 %v329, %v346
        %v352 = vadd.f32 %v330, %v348
        %v353 = vadd.f32 %v331, %v349
        %v354 = vmul.f32 %v345, %v345
        %v355 = vmul.f32 %v346, %v346
        %v356 = vadd.f32 %v334, %v354
        %v357 = vadd.f32 %v335, %v355
        %v358 = vmul.f32 %v348, %v348
        %v359 = vmul.f32 %v349, %v349
        %v360 = vadd.f32 %v338, %v358
        %v361 = vadd.f32 %v339, %v359
        %v362 = vmul.f32 %v345, %v348
        %v363 = vmul.f32 %v346, %v349
        %v364 = vadd.f32 %v342, %v362
        %v365 = vadd.f32 %v343, %v363
        %v366 = vld [vmem:[#allocation5] sm:$0xff]
        %v367 = vld [vmem:[#allocation5 + $0x8] sm:$0xff]
        %vm368 = vcmask 130048
        %v370 = vsel %vm368, %v350, 0
        %v373 = vsel %vm368, %v351, 0
        %v376 = vsel %vm368, %v352, 0
        %v379 = vsel %vm368, %v353, 0
        %v382 = vsel %vm368, %v356, 0
        %v385 = vsel %vm368, %v357, 0
        %v388 = vsel %vm368, %v360, 0
        %v391 = vsel %vm368, %v361, 0
        %v394 = vsel %vm368, %v364, 0
        %v397 = vsel %vm368, %v365, 0
        %399 = vmatprep.subr.mxu0 0.0
        %400 = vmatpush1.msra.mxu0 %v366
        %401 = vmatprep.subr.mxu0 0.0
        %402 = vmatpush1.msra.mxu0 %v367
        %403 = vmatprep.subr.mxu0 0.0
        %404 = vmatpush1.msra.mxu0 0.0
        %405 = vmatprep.subr.mxu0 0.0
        %406 = vmatpush1.msra.mxu0 0.0
        %407 = vmatprep.subr.mxu0 0.0
        %408 = vmatpush1.msra.mxu0 0.0
        %409 = vmatprep.subr.mxu0 0.0
        %410 = vmatpush1.msra.mxu0 0.0
        %411 = vmatprep.subr.mxu0 0.0
        %412 = vmatpush1.msra.mxu0 0.0
        %413 = vmatprep.subr.mxu0 0.0
        %414 = vmatpush1.msra.mxu0 0.0
        %415 = vmatprep.subr.mxu0 0.0
        %416 = vmatpush1.msra.mxu0 0.0
        %417 = vmatprep.subr.mxu0 0.0
        %418 = vmatpush1.msra.mxu0 0.0
        %419 = vmatprep.subr.mxu0 0.0
        %420 = vmatpush1.msra.mxu0 0.0
        %421 = vmatprep.subr.mxu0 0.0
        %422 = vmatpush1.msra.mxu0 0.0
        %423 = vmatprep.subr.mxu0 0.0
        %424 = vmatpush1.msra.mxu0 0.0
        %425 = vmatprep.subr.mxu0 0.0
        %426 = vmatpush1.msra.mxu0 0.0
        %427 = vmatprep.subr.mxu0 0.0
        %428 = vmatpush1.msra.mxu0 0.0
        %429 = vmatprep.subr.mxu0 0.0
        %430 = vmatpush1.msra.mxu0 0.0
        %431 = vmatprep.subr.mxu0 0.0
        %432 = vmatpush1.msra.mxu0 0.0
        %433 = vmatprep.subr.mxu0 0.0
        %434 = vmatpush1.msra.mxu0 0.0
        %435 = vmatprep.subr.mxu0 0.0
        %436 = vmatpush1.msra.mxu0 0.0
        %437 = vmatprep.subr.mxu0 0.0
        %438 = vmatpush1.msra.mxu0 0.0
        %439 = vmatprep.subr.mxu0 0.0
        %440 = vmatpush1.msra.mxu0 0.0
        %441 = vmatprep.subr.mxu0 0.0
        %442 = vmatpush1.msra.mxu0 0.0
        %443 = vmatprep.subr.mxu0 0.0
        %444 = vmatpush1.msra.mxu0 0.0
        %445 = vmatprep.subr.mxu0 0.0
        %446 = vmatpush1.msra.mxu0 0.0
        %447 = vmatprep.subr.mxu0 0.0
        %448 = vmatpush1.msra.mxu0 0.0
        %449 = vmatprep.subr.mxu0 0.0
        %450 = vmatpush1.msra.mxu0 0.0
        %451 = vmatprep.subr.mxu0 0.0
        %452 = vmatpush1.msra.mxu0 0.0
        %453 = vmatprep.subr.mxu0 0.0
        %454 = vmatpush1.msra.mxu0 0.0
        %455 = vmatprep.subr.mxu0 0.0
        %456 = vmatpush1.msra.mxu0 0.0
        %457 = vmatprep.subr.mxu0 0.0
        %458 = vmatpush1.msra.mxu0 0.0
        %459 = vmatprep.subr.mxu0 0.0
        %460 = vmatpush1.msra.mxu0 0.0
        %461 = vmatprep.subr.mxu0 0.0
        %462 = vmatpush1.msra.mxu0 0.0
        %463 = vmatprep.mubr.f32.mxu0 0.0
        %464 = vmatmul.mubr.f32.gmra.mrb[0].mxu0 %v370
        %v465 = vpop.f32.mrb[0].mxu0
        %v466 = vadd.f32 0.0, %v465
        %v467 = vpop.f32.mrb[0].mxu0
        %468 = vmatprep.mubr.f32.mxu0 0.0
        %469 = vmatmul.mubr.f32.gmra.mrb[0].mxu0 %v373
        %v470 = vpop.f32.mrb[0].mxu0
        %v471 = vadd.f32 0.0, %v470
        %v472 = vpop.f32.mrb[0].mxu0
        %473 = vmatprep.mubr.f32.mxu0 0.0
        %474 = vmatmul.mubr.f32.gmra.mrb[0].mxu0 %v376
        %v475 = vpop.f32.mrb[0].mxu0
        %v476 = vadd.f32 0.0, %v475
        %v477 = vpop.f32.mrb[0].mxu0
        %478 = vmatprep.mubr.f32.mxu0 0.0
        %479 = vmatmul.mubr.f32.gmra.mrb[0].mxu0 %v379
        %v480 = vpop.f32.mrb[0].mxu0
        %v481 = vadd.f32 0.0, %v480
        %v482 = vpop.f32.mrb[0].mxu0
        %483 = vmatprep.mubr.f32.mxu0 0.0
        %484 = vmatmul.mubr.f32.gmra.mrb[0].mxu0 %v382
        %v485 = vpop.f32.mrb[0].mxu0
        %v486 = vadd.f32 0.0, %v485
        %v487 = vpop.f32.mrb[0].mxu0
        %488 = vmatprep.mubr.f32.mxu0 0.0
        %489 = vmatmul.mubr.f32.gmra.mrb[0].mxu0 %v385
        %v490 = vpop.f32.mrb[0].mxu0
        %v491 = vadd.f32 0.0, %v490
        %v492 = vpop.f32.mrb[0].mxu0
        %493 = vmatprep.mubr.f32.mxu0 0.0
        %494 = vmatmul.mubr.f32.gmra.mrb[0].mxu0 %v388
        %v495 = vpop.f32.mrb[0].mxu0
        %v496 = vadd.f32 0.0, %v495
        %v497 = vpop.f32.mrb[0].mxu0
        %498 = vmatprep.mubr.f32.mxu0 0.0
        %499 = vmatmul.mubr.f32.gmra.mrb[0].mxu0 %v391
        %v500 = vpop.f32.mrb[0].mxu0
        %v501 = vadd.f32 0.0, %v500
        %v502 = vpop.f32.mrb[0].mxu0
        %503 = vmatprep.mubr.f32.mxu0 0.0
        %504 = vmatmul.mubr.f32.gmra.mrb[0].mxu0 %v394
        %v505 = vpop.f32.mrb[0].mxu0
        %v506 = vadd.f32 0.0, %v505
        %v507 = vpop.f32.mrb[0].mxu0
        %508 = vmatprep.mubr.f32.mxu0 0.0
        %509 = vmatmul.mubr.f32.gmra.mrb[0].mxu0 %v397
        %v510 = vpop.f32.mrb[0].mxu0
        %v511 = vadd.f32 0.0, %v510
        %v512 = vpop.f32.mrb[0].mxu0
        %513 = vdwg.mxu0
        %v514 = vld [vmem:[#allocation2] sm:$0xff]
        %v515 = vld [vmem:[#allocation2 + $0x8] sm:$0xff]
        %v516 = vld [vmem:[#allocation2 + $0x10] sm:$0xff]
        %v517 = vld [vmem:[#allocation2 + $0x18] sm:$0xff]
        %v518 = vld [vmem:[#allocation2 + $0x20] sm:$0xff]
        %v519 = vld [vmem:[#allocation2 + $0x28] sm:$0xff]
        %v520 = vld [vmem:[#allocation2 + $0x30] sm:$0xff]
        %v521 = vld [vmem:[#allocation2 + $0x38] sm:$0xff]
        %v522 = vld [vmem:[#allocation2 + $0x40] sm:$0xff]
        %v523 = vld [vmem:[#allocation2 + $0x48] sm:$0xff]
        %vm524 = vcmask 654336
        %v526 = vsel %vm524, %v514, 0
        %v529 = vsel %vm524, %v515, 0
        %v532 = vsel %vm524, %v516, 0
        %v535 = vsel %vm524, %v517, 0
        %v538 = vsel %vm524, %v518, 0
        %v541 = vsel %vm524, %v519, 0
        %v544 = vsel %vm524, %v520, 0
        %v547 = vsel %vm524, %v521, 0
        %v550 = vsel %vm524, %v522, 0
        %v553 = vsel %vm524, %v523, 0
        %555 = vmatprep.subr.mxu0 0.0
        %556 = vmatpush1.msra.mxu0 %v466
        %557 = vmatprep.subr.mxu0 0.0
        %558 = vmatpush1.msra.mxu0 %v471
        %559 = vmatprep.subr.mxu0 0.0
        %560 = vmatpush1.msra.mxu0 %v476
        %561 = vmatprep.subr.mxu0 0.0
        %562 = vmatpush1.msra.mxu0 %v481
        %563 = vmatprep.subr.mxu0 0.0
        %564 = vmatpush1.msra.mxu0 %v486
        %565 = vmatprep.subr.mxu0 0.0
        %566 = vmatpush1.msra.mxu0 %v491
        %567 = vmatprep.subr.mxu0 0.0
        %568 = vmatpush1.msra.mxu0 %v496
        %569 = vmatprep.subr.mxu0 0.0
        %570 = vmatpush1.msra.mxu0 %v501
        %571 = vmatprep.subr.mxu0 0.0
        %572 = vmatpush1.msra.mxu0 %v506
        %573 = vmatprep.subr.mxu0 0.0
        %574 = vmatpush1.msra.mxu0 %v511
        %575 = vmatprep.subr.mxu0 0.0
        %576 = vmatpush1.msra.mxu0 0.0
        %577 = vmatprep.subr.mxu0 0.0
        %578 = vmatpush1.msra.mxu0 0.0
        %579 = vmatprep.subr.mxu0 0.0
        %580 = vmatpush1.msra.mxu0 0.0
        %581 = vmatprep.subr.mxu0 0.0
        %582 = vmatpush1.msra.mxu0 0.0
        %583 = vmatprep.subr.mxu0 0.0
        %584 = vmatpush1.msra.mxu0 0.0
        %585 = vmatprep.subr.mxu0 0.0
        %586 = vmatpush1.msra.mxu0 0.0
        %587 = vmatprep.subr.mxu0 0.0
        %588 = vmatpush1.msra.mxu0 0.0
        %589 = vmatprep.subr.mxu0 0.0
        %590 = vmatpush1.msra.mxu0 0.0
        %591 = vmatprep.subr.mxu0 0.0
        %592 = vmatpush1.msra.mxu0 0.0
        %593 = vmatprep.subr.mxu0 0.0
        %594 = vmatpush1.msra.mxu0 0.0
        %595 = vmatprep.subr.mxu0 0.0
        %596 = vmatpush1.msra.mxu0 0.0
        %597 = vmatprep.subr.mxu0 0.0
        %598 = vmatpush1.msra.mxu0 0.0
        %599 = vmatprep.subr.mxu0 0.0
        %600 = vmatpush1.msra.mxu0 0.0
        %601 = vmatprep.subr.mxu0 0.0
        %602 = vmatpush1.msra.mxu0 0.0
        %603 = vmatprep.subr.mxu0 0.0
        %604 = vmatpush1.msra.mxu0 0.0
        %605 = vmatprep.subr.mxu0 0.0
        %606 = vmatpush1.msra.mxu0 0.0
        %607 = vmatprep.subr.mxu0 0.0
        %608 = vmatpush1.msra.mxu0 0.0
        %609 = vmatprep.subr.mxu0 0.0
        %610 = vmatpush1.msra.mxu0 0.0
        %611 = vmatprep.subr.mxu0 0.0
        %612 = vmatpush1.msra.mxu0 0.0
        %613 = vmatprep.subr.mxu0 0.0
        %614 = vmatpush1.msra.mxu0 0.0
        %615 = vmatprep.subr.mxu0 0.0
        %616 = vmatpush1.msra.mxu0 0.0
        %617 = vmatprep.subr.mxu0 0.0
        %618 = vmatpush1.msra.mxu0 0.0
        %619 = vmatprep.mubr.f32.mxu0 0.0
        %620 = vmatmul.mubr.f32.gmra.mrb[0].mxu0 %v526
        %v621 = vpop.f32.mrb[0].mxu0
        %v622 = vadd.f32 0.0, %v621
        %v623 = vpop.f32.mrb[0].mxu0
        %624 = vmatprep.mubr.f32.mxu0 0.0
        %625 = vmatmul.mubr.f32.gmra.mrb[0].mxu0 %v529
        %v626 = vpop.f32.mrb[0].mxu0
        %v627 = vadd.f32 0.0, %v626
        %v628 = vpop.f32.mrb[0].mxu0
        %629 = vmatprep.mubr.f32.mxu0 0.0
        %630 = vmatmul.mubr.f32.gmra.mrb[0].mxu0 %v532
        %v631 = vpop.f32.mrb[0].mxu0
        %v632 = vadd.f32 0.0, %v631
        %v633 = vpop.f32.mrb[0].mxu0
        %634 = vmatprep.mubr.f32.mxu0 0.0
        %635 = vmatmul.mubr.f32.gmra.mrb[0].mxu0 %v535
        %v636 = vpop.f32.mrb[0].mxu0
        %v637 = vadd.f32 0.0, %v636
        %v638 = vpop.f32.mrb[0].mxu0
        %639 = vmatprep.mubr.f32.mxu0 0.0
        %640 = vmatmul.mubr.f32.gmra.mrb[0].mxu0 %v538
        %v641 = vpop.f32.mrb[0].mxu0
        %v642 = vadd.f32 0.0, %v641
        %v643 = vpop.f32.mrb[0].mxu0
        %644 = vmatprep.mubr.f32.mxu0 0.0
        %645 = vmatmul.mubr.f32.gmra.mrb[0].mxu0 %v541
        %v646 = vpop.f32.mrb[0].mxu0
        %v647 = vadd.f32 0.0, %v646
        %v648 = vpop.f32.mrb[0].mxu0
        %649 = vmatprep.mubr.f32.mxu0 0.0
        %650 = vmatmul.mubr.f32.gmra.mrb[0].mxu0 %v544
        %v651 = vpop.f32.mrb[0].mxu0
        %v652 = vadd.f32 0.0, %v651
        %v653 = vpop.f32.mrb[0].mxu0
        %654 = vmatprep.mubr.f32.mxu0 0.0
        %655 = vmatmul.mubr.f32.gmra.mrb[0].mxu0 %v547
        %v656 = vpop.f32.mrb[0].mxu0
        %v657 = vadd.f32 0.0, %v656
        %v658 = vpop.f32.mrb[0].mxu0
        %659 = vmatprep.mubr.f32.mxu0 0.0
        %660 = vmatmul.mubr.f32.gmra.mrb[0].mxu0 %v550
        %v661 = vpop.f32.mrb[0].mxu0
        %v662 = vadd.f32 0.0, %v661
        %v663 = vpop.f32.mrb[0].mxu0
        %664 = vmatprep.mubr.f32.mxu0 0.0
        %665 = vmatmul.mubr.f32.gmra.mrb[0].mxu0 %v553
        %v666 = vpop.f32.mrb[0].mxu0
        %v667 = vadd.f32 0.0, %v666
        %v668 = vpop.f32.mrb[0].mxu0
        %669 = vdwg.mxu0
        %v670 = vmul.f32 %v622, 0.00077160494
        %v671 = vmul.f32 %v627, 0.00077160494
        %v672 = vmul.f32 %v632, 0.00077160494
        %v673 = vmul.f32 %v637, 0.00077160494
        %v674 = vmul.f32 %v672, %v622
        %v675 = vmul.f32 %v673, %v627
        %v676 = vsub.f32 %v662, %v674
        %v677 = vsub.f32 %v667, %v675
        %v678 = vmul.f32 %v670, %v632
        %v679 = vmul.f32 %v671, %v637
        %v680 = vsub.f32 %v676, %v678
        %v681 = vsub.f32 %v677, %v679
        %v682 = vmul.f32 %v670, %v672
        %v683 = vmul.f32 %v671, %v673
        %v684 = vmul.f32 %v682, 1296.0
        %v685 = vmul.f32 %v683, 1296.0
        %v686 = vadd.f32 %v680, %v684
        %v687 = vadd.f32 %v681, %v685
        %v688 = vmul.f32 %v670, 2.0
        %v689 = vmul.f32 %v671, 2.0
        %v690 = vmul.f32 %v688, %v622
        %v691 = vmul.f32 %v689, %v627
        %v692 = vsub.f32 %v642, %v690
        %v693 = vsub.f32 %v647, %v691
        %v694 = vmul.f32 %v670, %v670
        %v695 = vmul.f32 %v671, %v671
        %v696 = vmul.f32 %v694, 1296.0
        %v697 = vmul.f32 %v695, 1296.0
        %v698 = vadd.f32 %v692, %v696
        %v699 = vadd.f32 %v693, %v697
        %v700 = vmul.f32 %v672, 2.0
        %v701 = vmul.f32 %v673, 2.0
        %v702 = vmul.f32 %v700, %v632
        %v703 = vmul.f32 %v701, %v637
        %v704 = vsub.f32 %v652, %v702
        %v705 = vsub.f32 %v657, %v703
        %v706 = vmul.f32 %v672, %v672
        %v707 = vmul.f32 %v673, %v673
        %v708 = vmul.f32 %v706, 1296.0
        %v709 = vmul.f32 %v707, 1296.0
        %v710 = vadd.f32 %v704, %v708
        %v711 = vadd.f32 %v705, %v709
        %v712 = vmax.f32 %v698, 1e-06
        %v713 = vmax.f32 %v699, 1e-06
        %v714 = vrsqrt.pop %v712
        %v715 = vrsqrt.pop %v713
        %v716 = vmul.f32 %v686, %v714
        %v717 = vmul.f32 %v687, %v715
        %v718 = vmax.f32 %v710, 1e-06
        %v719 = vmax.f32 %v711, 1e-06
        %v720 = vrsqrt.pop %v718
        %v721 = vrsqrt.pop %v719
        %v722 = vmul.f32 %v716, %v720
        %v723 = vmul.f32 %v717, %v721
        %v724 = vsel %vm368, %v722, 0.0
        %v725 = vsel %vm368, %v723, 0.0
        %v726 = vadd.f32 %v724, %v725
        %727 = vadd.xlane.f32.xlu0 %v726
        %v728 = vpop.xlane.xlu0 %727
        %v729 = vrot.slane %v728, 4
        %v730 = vadd.f32 %v728, %v729
        %v731 = vrot.slane %v730, 2
        %v732 = vadd.f32 %v730, %v731
        %v733 = vrot.slane %v732, 1
        %v734 = vadd.f32 %v732, %v733
        %s735 = vtos %v734
        %v736 = vstv %s735
        %737 = vst [vmem:[%s279] sm:$0xff] %v736
        %s738 = sand.u32 %s122, 1
        %s739 = scalar_lea.sflag [#allocation4], %s738
        %s740 = sand.u32 %s122, 1
        %s741 = smul.addr %s740, 8
        %s742 = scalar_lea.vmem [#allocation9], %s741
        // Predicated region
        $region53: #{tpu_custom_call.1} parent=35 // pred_check
          %p743 = pneg %p132
        $region54: #{tpu_custom_call.1} parent=35 // pred_check_branch
          %745 = sbr.rel (%p743) target = $region56
        $region55: #{tpu_custom_call.1} parent=35 // pred_region
          %s747 = ssub.s32 128, 128
          %748 = vsyncadd %s739, %s747
          %s749 = smul.addr %s20, 128
          %s750 = scalar_lea.hbm %s4, %s749
          %s752 = sshll.u32 %s742, 4
          %s753 = int_to_ptr.vmem [resolvable:$true] %s752
          %755 = dma.vmem_to_hbm [thread:$0]  %s753, 128, %s750, %s739
        $region56: #{tpu_custom_call.1} parent=35 // pred_fallthru
          _
      $region36: #{tpu_custom_call.1} parent=5 // pred_fallthru
        _
      %p756 = scmp.le.s32.totalorder 2, %s15
      // Predicated region
      $region57: #{tpu_custom_call.1} parent=5 // pred_check
        %p757 = pneg %p756
      $region58: #{tpu_custom_call.1} parent=5 // pred_check_branch
        %759 = sbr.rel (%p757) target = $region60
      $region59: #{tpu_custom_call.1} parent=5 // pred_region
        %s760 = ssub.s32 %s15, 2
        // Predicated region
        $region61: #{tpu_custom_call.1} parent=59 // pred_check
          %p761 = pneg %p138
        $region62: #{tpu_custom_call.1} parent=59 // pred_check_branch
          %763 = sbr.rel (%p761) target = $region64
        $region63: #{tpu_custom_call.1} parent=59 // pred_region
          %s764 = sand.u32 %s123, 1
          %s765 = scalar_lea.sflag [#allocation4], %s764
          %s766 = sand.u32 %s123, 1
          %s767 = smul.addr %s766, 8
          %s768 = scalar_lea.vmem [#allocation9], %s767
          %769 = dma.done %s765, 128
        $region64: #{tpu_custom_call.1} parent=59 // pred_fallthru
          _
      $region60: #{tpu_custom_call.1} parent=5 // pred_fallthru
        _
    $region6: #{tpu_custom_call.1} parent=1 // loop_footer
      %s19 = sadd.s32 1, %s15
    $region7: #{tpu_custom_call.1} parent=1 // loop_footer_branch
      %14 = sbr.rel target = $region3
    $region8: #{tpu_custom_call.1} parent=1 // loop_exit
      _
    %770 = vsyncpa [#allocation3], 1
    %s771 = scalar_lea.sflag [#allocation3], 1
    %772 = vsyncpa %s771, 1
    %773 = vsyncpa [#allocation6], 1
    %774 = vsyncpa [#allocation4], 1
    %s775 = scalar_lea.sflag [#allocation4], 1
    %776 = vsyncpa %s775, 1

</llo_original>
